<compile_context>
chip_gen: v7x
topology: tpu7x:2x2x1
jax: 0.10.0
libtpu: 0.0.40
codegen_flags: <defaults>
</compile_context>

<pallas_src>
import functools

import jax
import jax.numpy as jnp
from jax.experimental import pallas as pl
from jax.experimental.pallas import tpu as pltpu


def _round_up(x, m):
    return ((x + m - 1) // m) * m


def cbow_kernel(idx_ref, emb_ref, w_ref, b_ref, out_ref,
                emb_scratch, m_scratch, l_scratch, *, context_size):
    """Grid = (num_b_tiles, 2 passes, num_v_tiles).

    pass 0: accumulate running max / running sum-exp of the logits over V tiles.
    pass 1: recompute the logits tile and write log_softmax = z - (m + log l).
    """
    bi = pl.program_id(0)
    p = pl.program_id(1)
    vi = pl.program_id(2)

    tb = emb_scratch.shape[0]
    inv_c = jnp.float32(1.0 / context_size)

    # Once per batch tile: gather the context-word embeddings (SMEM indices ->
    # dynamic row slices of the resident table), average them, and reset the
    # online-softmax statistics.
    @pl.when(jnp.logical_and(p == 0, vi == 0))
    def _init():
        def gather_row(b, carry):
            base = (bi * tb + b) * context_size
            acc = emb_ref[pl.ds(idx_ref[base], 1), :].astype(jnp.float32)
            for c in range(1, context_size):
                acc = acc + emb_ref[pl.ds(idx_ref[base + c], 1), :].astype(jnp.float32)
            emb_scratch[pl.ds(b, 1), :] = acc * inv_c
            return carry

        jax.lax.fori_loop(0, tb, gather_row, 0)
        m_scratch[...] = jnp.full(m_scratch.shape, -jnp.inf, m_scratch.dtype)
        l_scratch[...] = jnp.zeros(l_scratch.shape, l_scratch.dtype)

    # Logits tile: (TB, E) contracted with (TV, E) over E -> (TB, TV) on the MXU.
    z = jax.lax.dot_general(
        emb_scratch[...], w_ref[...],
        dimension_numbers=(((1,), (1,)), ((), ())),
        preferred_element_type=jnp.float32) + b_ref[...]

    @pl.when(p == 0)
    def _stats():
        m_prev = m_scratch[...]
        m_new = jnp.maximum(m_prev, jnp.max(z, axis=-1, keepdims=True))
        l_scratch[...] = (l_scratch[...] * jnp.exp(m_prev - m_new)
                          + jnp.sum(jnp.exp(z - m_new), axis=-1, keepdims=True))
        m_scratch[...] = m_new
        out_ref[...] = z.astype(out_ref.dtype)  # placeholder, overwritten in pass 1

    @pl.when(p == 1)
    def _write():
        lse = m_scratch[...] + jnp.log(l_scratch[...])
        out_ref[...] = (z - lse).astype(out_ref.dtype)


def cbow_forward(indices, emb_table, lin_w, lin_b, *, block_b=None, block_v=None):
    """indices (B,C) int; emb_table (V,E); lin_w (V,E); lin_b (V,). Returns (B,V)."""
    B, C = indices.shape
    V, E = emb_table.shape
    assert lin_w.shape == (V, E) and lin_b.shape == (V,)

    if block_b is None:
        block_b = min(128, _round_up(B, 8))      # sublane-aligned batch tile
    if block_v is None:
        block_v = min(512, _round_up(V, 128))    # lane-dense vocab tile

    B_pad = _round_up(B, block_b)
    V_pad = _round_up(V, block_v)

    # Pad batch (index 0 is a valid row; padded outputs are sliced off) and
    # vocab (zero weight rows + -1e30 bias so they never affect the softmax).
    idx = indices.astype(jnp.int32)
    if B_pad != B:
        idx = jnp.pad(idx, ((0, B_pad - B), (0, 0)))
    idx_flat = idx.reshape(-1)                   # 1-D -> compact SMEM layout

    w = lin_w
    b = lin_b
    if V_pad != V:
        w = jnp.pad(w, ((0, V_pad - V), (0, 0)))
        b = jnp.pad(b, (0, V_pad - V), constant_values=-1e30)
    bias2d = b.reshape(1, V_pad)

    grid = (B_pad // block_b, 2, V_pad // block_v)

    out = pl.pallas_call(
        functools.partial(cbow_kernel, context_size=C),
        out_shape=jax.ShapeDtypeStruct((B_pad, V_pad), jnp.float32),
        grid_spec=pltpu.PrefetchScalarGridSpec(
            num_scalar_prefetch=1,               # indices land in SMEM
            grid=grid,
            in_specs=[
                # Embedding table: whole array, resident (same block every step).
                # TODO(synk): for very large V*E, gather rows straight from HBM
                # (memory_space=pl.ANY + manual DMA) instead of keeping it in VMEM.
                pl.BlockSpec((V, E), lambda bi, p, vi, idx_s: (0, 0)),
                # Linear weight in native (V, E) layout, tiled over V.
                pl.BlockSpec((block_v, E), lambda bi, p, vi, idx_s: (vi, 0)),
                # Bias tile.
                pl.BlockSpec((1, block_v), lambda bi, p, vi, idx_s: (0, vi)),
            ],
            out_specs=pl.BlockSpec((block_b, block_v),
                                   lambda bi, p, vi, idx_s: (bi, vi)),
            scratch_shapes=[
                pltpu.VMEM((block_b, E), jnp.float32),  # mean context embeddings
                pltpu.VMEM((block_b, 1), jnp.float32),  # running max
                pltpu.VMEM((block_b, 1), jnp.float32),  # running sum-exp
            ],
        ),
        compiler_params=pltpu.CompilerParams(
            dimension_semantics=("parallel", "arbitrary", "arbitrary")),
    )(idx_flat, emb_table, w, bias2d)

    return out[:B, :V]


def cbow_reference(indices, emb_table, lin_w, lin_b):
    embeds = jnp.mean(emb_table[indices], axis=1)          # (B, E)
    outs = embeds @ lin_w.T + lin_b                        # (B, V)
    return jax.nn.log_softmax(outs, axis=-1)


if __name__ == "__main__":
    # Small, forward-implied shapes: vocab=512, embed=64, batch=12, context=4.
    vocab_dim, embed_dim = 512, 64
    batch, context = 12, 4

    key = jax.random.PRNGKey(0)
    k_emb, k_w, k_b, k_idx = jax.random.split(key, 4)

    emb_table = jax.random.normal(k_emb, (vocab_dim, embed_dim), jnp.float32)
    lin_w = jax.random.normal(k_w, (vocab_dim, embed_dim), jnp.float32) * 0.1
    lin_b = jax.random.normal(k_b, (vocab_dim,), jnp.float32) * 0.1
    indices = jax.random.randint(k_idx, (batch, context), 0, vocab_dim, jnp.int32)

    # Small tiles so the demo exercises multiple B tiles, multiple V tiles and
    # the two-pass online log-softmax (grid = (2, 2, 4)).
    log_probs = cbow_forward(indices, emb_table, lin_w, lin_b,
                             block_b=8, block_v=128)
    log_probs = jax.block_until_ready(log_probs)

    ref = cbow_reference(indices, emb_table, lin_w, lin_b)
    assert log_probs.shape == (batch, vocab_dim)
    assert jnp.allclose(log_probs, ref, rtol=1e-4, atol=1e-4), "mismatch vs JAX reference"

    print("KERNEL_OK")
</pallas_src>

<mosaic_0001>
module attributes {stable_mosaic.version = 11 : i64} {
  func.func @cbow_kernel(%arg0: i32, %arg1: i32, %arg2: i32, %arg3: memref<64xi32, #tpu.memory_space<smem>>, %arg4: memref<512x64xf32, #tpu.memory_space<vmem>>, %arg5: memref<128x64xf32, #tpu.memory_space<vmem>>, %arg6: memref<1x128xf32, #tpu.memory_space<vmem>>, %arg7: memref<8x128xf32, #tpu.memory_space<vmem>>, %arg8: memref<8x64xf32, #tpu.memory_space<vmem>>, %arg9: memref<8x1xf32, #tpu.memory_space<vmem>>, %arg10: memref<8x1xf32, #tpu.memory_space<vmem>>) attributes {dimension_semantics = [#tpu.dimension_semantics<parallel>, #tpu.dimension_semantics<arbitrary>, #tpu.dimension_semantics<arbitrary>], iteration_bounds = array<i64: 2, 2, 4>, scalar_prefetch = 1 : i64, scratch_operands = 3 : i64, tpu.core_type = #tpu.core_type<tc>, window_params = [{pipeline_mode = #tpu.pipeline_mode<synchronous>, transform_indices = @transform_0, window_bounds = array<i64: 512, 64>}, {transform_indices = @transform_1, window_bounds = array<i64: 128, 64>}, {transform_indices = @transform_2, window_bounds = array<i64: 1, 128>}, {transform_indices = @transform_3, window_bounds = array<i64: 8, 128>}]} {
    %c0_i32 = arith.constant 0 : i32
    %0 = arith.cmpi eq, %arg1, %c0_i32 : i32
    %c0_i32_0 = arith.constant 0 : i32
    %1 = arith.cmpi eq, %arg2, %c0_i32_0 : i32
    %2 = arith.andi %0, %1 : i1
    %3 = arith.extui %2 : i1 to i32
    %cst = arith.constant 2.500000e-01 : f32
    %c0_i32_1 = arith.constant 0 : i32
    %4 = arith.cmpi ne, %3, %c0_i32_1 : i32
    scf.if %4 {
      %c0_i32_11 = arith.constant 0 : i32
      %c8_i32 = arith.constant 8 : i32
      %17 = arith.addi %c0_i32_11, %c8_i32 : i32
      %c1_i32_12 = arith.constant 1 : i32
      scf.for %arg11 = %c0_i32_11 to %17 step %c1_i32_12  : i32 {
        %c8_i32_20 = arith.constant 8 : i32
        %22 = arith.muli %arg0, %c8_i32_20 : i32
        %23 = arith.addi %22, %arg11 : i32
        %c4_i32 = arith.constant 4 : i32
        %24 = arith.muli %23, %c4_i32 : i32
        %25 = arith.index_cast %24 : i32 to index
        %26 = memref.load %arg3[%25] : memref<64xi32, #tpu.memory_space<smem>>
        %27 = arith.index_cast %26 : i32 to index
        %c0_21 = arith.constant 0 : index
        %28 = vector.load %arg4[%27, %c0_21] : memref<512x64xf32, #tpu.memory_space<vmem>>, vector<1x64xf32>
        %c1_i32_22 = arith.constant 1 : i32
        %29 = arith.addi %24, %c1_i32_22 : i32
        %30 = arith.index_cast %29 : i32 to index
        %31 = memref.load %arg3[%30] : memref<64xi32, #tpu.memory_space<smem>>
        %32 = arith.index_cast %31 : i32 to index
        %c0_23 = arith.constant 0 : index
        %33 = vector.load %arg4[%32, %c0_23] : memref<512x64xf32, #tpu.memory_space<vmem>>, vector<1x64xf32>
        %34 = arith.addf %28, %33 : vector<1x64xf32>
        %c2_i32 = arith.constant 2 : i32
        %35 = arith.addi %24, %c2_i32 : i32
        %36 = arith.index_cast %35 : i32 to index
        %37 = memref.load %arg3[%36] : memref<64xi32, #tpu.memory_space<smem>>
        %38 = arith.index_cast %37 : i32 to index
        %c0_24 = arith.constant 0 : index
        %39 = vector.load %arg4[%38, %c0_24] : memref<512x64xf32, #tpu.memory_space<vmem>>, vector<1x64xf32>
        %40 = arith.addf %34, %39 : vector<1x64xf32>
        %c3_i32 = arith.constant 3 : i32
        %41 = arith.addi %24, %c3_i32 : i32
        %42 = arith.index_cast %41 : i32 to index
        %43 = memref.load %arg3[%42] : memref<64xi32, #tpu.memory_space<smem>>
        %44 = arith.index_cast %43 : i32 to index
        %c0_25 = arith.constant 0 : index
        %45 = vector.load %arg4[%44, %c0_25] : memref<512x64xf32, #tpu.memory_space<vmem>>, vector<1x64xf32>
        %46 = arith.addf %40, %45 : vector<1x64xf32>
        %47 = vector.broadcast %cst : f32 to vector<1x64xf32>
        %48 = arith.mulf %46, %47 : vector<1x64xf32>
        %49 = arith.index_cast %arg11 : i32 to index
        %c0_26 = arith.constant 0 : index
        %50 = vector.load %arg8[%49, %c0_26] : memref<8x64xf32, #tpu.memory_space<vmem>>, vector<1x64xf32>
        tpu.vector_store %arg8[%49, %c0_26], %48 {strides = array<i32>} : memref<8x64xf32, #tpu.memory_space<vmem>>, vector<1x64xf32>,
      }
      %c8_i32_13 = arith.constant 8 : i32
      %cst_14 = arith.constant 0xFF800000 : f32
      %18 = vector.broadcast %cst_14 : f32 to vector<8x1xf32>
      %c0_15 = arith.constant 0 : index
      %c0_16 = arith.constant 0 : index
      %19 = vector.load %arg9[%c0_15, %c0_16] : memref<8x1xf32, #tpu.memory_space<vmem>>, vector<8x1xf32>
      tpu.vector_store %arg9[%c0_15, %c0_16], %18 {strides = array<i32>} : memref<8x1xf32, #tpu.memory_space<vmem>>, vector<8x1xf32>,
      %cst_17 = arith.constant 0.000000e+00 : f32
      %20 = vector.broadcast %cst_17 : f32 to vector<8x1xf32>
      %c0_18 = arith.constant 0 : index
      %c0_19 = arith.constant 0 : index
      %21 = vector.load %arg10[%c0_18, %c0_19] : memref<8x1xf32, #tpu.memory_space<vmem>>, vector<8x1xf32>
      tpu.vector_store %arg10[%c0_18, %c0_19], %20 {strides = array<i32>} : memref<8x1xf32, #tpu.memory_space<vmem>>, vector<8x1xf32>,
    } else {
    }
    %c0 = arith.constant 0 : index
    %c0_2 = arith.constant 0 : index
    %5 = vector.load %arg8[%c0, %c0_2] : memref<8x64xf32, #tpu.memory_space<vmem>>, vector<8x64xf32>
    %c0_3 = arith.constant 0 : index
    %c0_4 = arith.constant 0 : index
    %6 = vector.load %arg5[%c0_3, %c0_4] : memref<128x64xf32, #tpu.memory_space<vmem>>, vector<128x64xf32>
    %cst_5 = arith.constant dense<0.000000e+00> : vector<8x128xf32>
    %7 = tpu.matmul %5, %6, %cst_5 {dimension_numbers = #tpu.dot_dimension_numbers<[1], [1], [0], [0], [0, 0, 1, 0], [], []>} : vector<8x64xf32>, vector<128x64xf32>, vector<8x128xf32> -> vector<8x128xf32>
    %c0_6 = arith.constant 0 : index
    %c0_7 = arith.constant 0 : index
    %8 = vector.load %arg6[%c0_6, %c0_7] : memref<1x128xf32, #tpu.memory_space<vmem>>, vector<1x128xf32>
    %9 = vector.broadcast %8 : vector<1x128xf32> to vector<8x128xf32>
    %10 = arith.addf %7, %9 : vector<8x128xf32>
    %c0_i32_8 = arith.constant 0 : i32
    %11 = arith.cmpi eq, %arg1, %c0_i32_8 : i32
    %12 = arith.extui %11 : i1 to i32
    %c0_i32_9 = arith.constant 0 : i32
    %13 = arith.cmpi ne, %12, %c0_i32_9 : i32
    scf.if %13 {
      %c0_11 = arith.constant 0 : index
      %c0_12 = arith.constant 0 : index
      %17 = vector.load %arg9[%c0_11, %c0_12] : memref<8x1xf32, #tpu.memory_space<vmem>>, vector<8x1xf32>
      %cst_13 = arith.constant dense<0xFF800000> : vector<8xf32>
      %18 = vector.multi_reduction <maximumf>, %10, %cst_13 [1] : vector<8x128xf32> to vector<8xf32>
      %19 = vector.shape_cast %18 : vector<8xf32> to vector<8x1xf32>
      %20 = arith.maximumf %17, %19 : vector<8x1xf32>
      %c0_14 = arith.constant 0 : index
      %c0_15 = arith.constant 0 : index
      %21 = vector.load %arg10[%c0_14, %c0_15] : memref<8x1xf32, #tpu.memory_space<vmem>>, vector<8x1xf32>
      %22 = arith.subf %17, %20 : vector<8x1xf32>
      %23 = math.exp %22 : vector<8x1xf32>
      %24 = arith.mulf %21, %23 : vector<8x1xf32>
      %25 = vector.broadcast %20 : vector<8x1xf32> to vector<8x128xf32>
      %26 = arith.subf %10, %25 : vector<8x128xf32>
      %27 = math.exp %26 : vector<8x128xf32>
      %cst_16 = arith.constant dense<0.000000e+00> : vector<8xf32>
      %28 = vector.multi_reduction <add>, %27, %cst_16 [1] : vector<8x128xf32> to vector<8xf32>
      %29 = vector.shape_cast %28 : vector<8xf32> to vector<8x1xf32>
      %30 = arith.addf %24, %29 : vector<8x1xf32>
      %c0_17 = arith.constant 0 : index
      %c0_18 = arith.constant 0 : index
      %31 = vector.load %arg10[%c0_17, %c0_18] : memref<8x1xf32, #tpu.memory_space<vmem>>, vector<8x1xf32>
      tpu.vector_store %arg10[%c0_17, %c0_18], %30 {strides = array<i32>} : memref<8x1xf32, #tpu.memory_space<vmem>>, vector<8x1xf32>,
      %c0_19 = arith.constant 0 : index
      %c0_20 = arith.constant 0 : index
      %32 = vector.load %arg9[%c0_19, %c0_20] : memref<8x1xf32, #tpu.memory_space<vmem>>, vector<8x1xf32>
      tpu.vector_store %arg9[%c0_19, %c0_20], %20 {strides = array<i32>} : memref<8x1xf32, #tpu.memory_space<vmem>>, vector<8x1xf32>,
      %c0_21 = arith.constant 0 : index
      %c0_22 = arith.constant 0 : index
      %33 = vector.load %arg7[%c0_21, %c0_22] : memref<8x128xf32, #tpu.memory_space<vmem>>, vector<8x128xf32>
      tpu.vector_store %arg7[%c0_21, %c0_22], %10 {strides = array<i32>} : memref<8x128xf32, #tpu.memory_space<vmem>>, vector<8x128xf32>,
    } else {
    }
    %c1_i32 = arith.constant 1 : i32
    %14 = arith.cmpi eq, %arg1, %c1_i32 : i32
    %15 = arith.extui %14 : i1 to i32
    %c0_i32_10 = arith.constant 0 : i32
    %16 = arith.cmpi ne, %15, %c0_i32_10 : i32
    scf.if %16 {
      %c0_11 = arith.constant 0 : index
      %c0_12 = arith.constant 0 : index
      %17 = vector.load %arg9[%c0_11, %c0_12] : memref<8x1xf32, #tpu.memory_space<vmem>>, vector<8x1xf32>
      %c0_13 = arith.constant 0 : index
      %c0_14 = arith.constant 0 : index
      %18 = vector.load %arg10[%c0_13, %c0_14] : memref<8x1xf32, #tpu.memory_space<vmem>>, vector<8x1xf32>
      %19 = math.log %18 : vector<8x1xf32>
      %20 = arith.addf %17, %19 : vector<8x1xf32>
      %21 = vector.broadcast %20 : vector<8x1xf32> to vector<8x128xf32>
      %22 = arith.subf %10, %21 : vector<8x128xf32>
      %c0_15 = arith.constant 0 : index
      %c0_16 = arith.constant 0 : index
      %23 = vector.load %arg7[%c0_15, %c0_16] : memref<8x128xf32, #tpu.memory_space<vmem>>, vector<8x128xf32>
      tpu.vector_store %arg7[%c0_15, %c0_16], %22 {strides = array<i32>} : memref<8x128xf32, #tpu.memory_space<vmem>>, vector<8x128xf32>,
    } else {
    }
    return
  }
  func.func @transform_0(%arg0: i32, %arg1: i32, %arg2: i32, %arg3: memref<64xi32, #tpu.memory_space<smem>>) -> (i32, i32) {
    %c0_i32 = arith.constant 0 : i32
    %c0_i32_0 = arith.constant 0 : i32
    %c0_i32_1 = arith.constant 0 : i32
    return %c0_i32, %c0_i32_0 : i32, i32
  }
  func.func @transform_1(%arg0: i32, %arg1: i32, %arg2: i32, %arg3: memref<64xi32, #tpu.memory_space<smem>>) -> (i32, i32) {
    %c0_i32 = arith.constant 0 : i32
    %c0_i32_0 = arith.constant 0 : i32
    return %arg2, %c0_i32 : i32, i32
  }
  func.func @transform_2(%arg0: i32, %arg1: i32, %arg2: i32, %arg3: memref<64xi32, #tpu.memory_space<smem>>) -> (i32, i32) {
    %c0_i32 = arith.constant 0 : i32
    %c0_i32_0 = arith.constant 0 : i32
    return %c0_i32, %arg2 : i32, i32
  }
  func.func @transform_3(%arg0: i32, %arg1: i32, %arg2: i32, %arg3: memref<64xi32, #tpu.memory_space<smem>>) -> (i32, i32) {
    %c0_i32 = arith.constant 0 : i32
    return %arg0, %arg2 : i32, i32
  }
}

</mosaic_0001>

<llo_original>
// kernel: tpu_custom_call.1
$region0: #{tpu_custom_call.1}
  #allocation0 [shape = 'u32[]', space=smem, size = 0x4, offset = 0x4, fixed_abs, tag = 'smem constant byte address 0x4 - core index']
  #allocation1 [shape = 'u32[144,128]{1,0:T(1,128)}', space=vmem, size = 0x12000, scoped, tag = 'internal scratch']
  #allocation2 [shape = 'f32[8,64]{1,0:T(8,128)}', space=vmem, size = 0x1000, scoped, tag = 'scratch operand']
  #allocation3 [shape = 'f32[8,1]{1,0:T(8,128)}', space=vmem, size = 0x1000, scoped, tag = 'scratch operand']
  #allocation4 [shape = 'f32[8,1]{1,0:T(8,128)}', space=vmem, size = 0x1000, scoped, tag = 'scratch operand']
  #allocation5 [shape = 's32[1]{0}', space=sflag, size = 0x4, scoped, tag = 'scoped memory for tpu_custom_call.1']
  #allocation6 [shape = 'u8[512]{0}', space=smem, size = 0x200, scoped, tag = 'prefetched SMEM operand 0']
  %s0 = inlined_call_operand.vmem [shape: s32[64], index: 0, kind: input, shape index: {}]
  %s1 = inlined_call_operand.vmem [shape: f32[512,64], index: 1, kind: input, shape index: {}]
  %s2 = inlined_call_operand.vmem [shape: f32[512,64], index: 2, kind: input, shape index: {}]
  %s3 = inlined_call_operand.vmem [shape: f32[1,512], index: 3, kind: input, shape index: {}]
  %s4 = inlined_call_operand.hbm [shape: f32[16,512], index: 4, kind: output, shape index: {}]
  %s5 = sld [smem:[#allocation0]]
  $region64: #{tpu_custom_call.1} parent=0
    _
  %s7 = ssub.s32 1, %s5
  %s8 = scalar_select 0, %s7, %s5
  %s9 = sshll.u32 %s0, 4
  %s10 = int_to_ptr.vmem [resolvable:$true] %s9
  %12 = dma.vmem_to_smem %s10, 16, [#allocation6], [#allocation5]
  %13 = dma.done [#allocation5], 16
  %14 = sfence
  $region1: #{tpu_custom_call.1} parent=0
    #allocation7 [shape = 'u8[8192]{0}', space=vmem, size = 0x2000, scoped, tag = 'output window, operand 0']
    #allocation8 [shape = 's32[2]{0}', space=sflag, size = 0x8, scoped, tag = 'scoped memory for tpu_custom_call.1']
    %15 = vsyncpa [#allocation8], 0
    %s16 = scalar_lea.sflag [#allocation8], 1
    %17 = vsyncpa %s16, 0
    loop: start=0, step=1, limit=18
    $region2: #{tpu_custom_call.1} parent=1 // loop_pre_header
      _
    $region3: #{tpu_custom_call.1} parent=1 // loop_header
      %s19 = sphi 0, %s23
      %p20 = scmp.ge.s32.totalorder %s19, 18
      %s26 = sphi 0, %s45
      %s27 = sphi 0, %s41
      %s28 = sphi 0, %s37
      %s29 = sphi 0, %s26
      %s30 = sphi 0, %s27
      %s31 = sphi 0, %s28
      %s32 = sphi 0, %s29
      %s33 = sphi 0, %s30
      %s34 = sphi 0, %s31
      %s46 = sphi 0, %s46
      %s48 = sphi 0, %s46
      %s49 = sphi 0, %s48
      %s63 = sphi 0, %s49
      %s69 = sphi 0, %s71
      %s72 = sphi 0, %s69
      %s73 = sphi 0, %s72
      %s89 = sphi 0, %s73
      %s95 = sphi 0, %s97
      %s98 = sphi 0, %s95
      %s99 = sphi 0, %s98
      %s115 = sphi 0, %s99
      %s123 = sphi 0, %s125
      %s126 = sphi 0, %s123
      %s127 = sphi 0, %s126
      %s143 = sphi 0, %s127
    $region4: #{tpu_custom_call.1} parent=1 // loop_header_branch
      %22 = sbr.rel (%p20) target = $region8
    $region5: #{tpu_custom_call.1} parent=1 // loop_body
      %s24 = ssub.s32 %s19, 1
      %s25 = ssub.s32 %s19, 2
      %s35 = sadd.s32 1, %s28
      %p36 = scmp.ge.s32.totalorder %s35, 4
      %s37 = scalar_select %p36, 0, %s35
      %s38 = sadd.s32 1, %s27
      %s39 = scalar_select %p36, %s38, %s27
      %p40 = scmp.ge.s32.totalorder %s39, 2
      %s41 = scalar_select %p40, 0, %s39
      %s42 = sadd.s32 1, %s26
      %s43 = scalar_select %p40, %s42, %s26
      %p44 = scmp.ge.s32.totalorder %s43, 2
      %s45 = scalar_select %p44, 0, %s43
      %s47 = sadd.s32 %s46, 1
      %p50 = scmp.eq.s32.totalorder %s19, 15
      %p51 = scmp.ne.s32.totalorder %s46, %s48
      %p52 = scmp.eq.s32.totalorder %s19, 0
      %p53 = por %p51, %p52
      %p54 = scmp.ne.s32.totalorder %s46, %s48
      %p55 = scmp.eq.s32.totalorder %s24, 15
      %p56 = por %p54, %p55
      %p57 = scmp.ne.s32.totalorder %s48, %s49
      %p58 = scmp.eq.s32.totalorder %s24, 0
      %p59 = por %p57, %p58
      %p60 = scmp.ne.s32.totalorder %s48, %s49
      %p61 = scmp.eq.s32.totalorder %s25, 15
      %p62 = por %p60, %p61
      %p64 = scmp.ne.s32.totalorder %s49, %s63
      %p65 = scmp.eq.s32.totalorder %s25, 0
      %p66 = por %p64, %p65
      %s67 = ssub.s32 %s28, %s37
      %p68 = scmp.eq.s32.totalorder %s67, 0
      %s70 = sadd.s32 %s69, 1
      %s71 = scalar_select %p68, %s69, %s70
      %p74 = pneg %p68
      %p75 = scmp.eq.s32.totalorder %s19, 15
      %p76 = por %p74, %p75
      %p77 = scmp.ne.s32.totalorder %s69, %s72
      %p78 = scmp.eq.s32.totalorder %s19, 0
      %p79 = por %p77, %p78
      %p80 = scmp.ne.s32.totalorder %s69, %s72
      %p81 = scmp.eq.s32.totalorder %s24, 15
      %p82 = por %p80, %p81
      %p83 = scmp.ne.s32.totalorder %s72, %s73
      %p84 = scmp.eq.s32.totalorder %s24, 0
      %p85 = por %p83, %p84
      %p86 = scmp.ne.s32.totalorder %s72, %s73
      %p87 = scmp.eq.s32.totalorder %s25, 15
      %p88 = por %p86, %p87
      %p90 = scmp.ne.s32.totalorder %s73, %s89
      %p91 = scmp.eq.s32.totalorder %s25, 0
      %p92 = por %p90, %p91
      %s93 = ssub.s32 %s28, %s37
      %p94 = scmp.eq.s32.totalorder %s93, 0
      %s96 = sadd.s32 %s95, 1
      %s97 = scalar_select %p94, %s95, %s96
      %p100 = pneg %p94
      %p101 = scmp.eq.s32.totalorder %s19, 15
      %p102 = por %p100, %p101
      %p103 = scmp.ne.s32.totalorder %s95, %s98
      %p104 = scmp.eq.s32.totalorder %s19, 0
      %p105 = por %p103, %p104
      %p106 = scmp.ne.s32.totalorder %s95, %s98
      %p107 = scmp.eq.s32.totalorder %s24, 15
      %p108 = por %p106, %p107
      %p109 = scmp.ne.s32.totalorder %s98, %s99
      %p110 = scmp.eq.s32.totalorder %s24, 0
      %p111 = por %p109, %p110
      %p112 = scmp.ne.s32.totalorder %s98, %s99
      %p113 = scmp.eq.s32.totalorder %s25, 15
      %p114 = por %p112, %p113
      %p116 = scmp.ne.s32.totalorder %s99, %s115
      %p117 = scmp.eq.s32.totalorder %s25, 0
      %p118 = por %p116, %p117
      %s119 = ssub.s32 %s26, %s45
      %s120 = ssub.s32 %s28, %s37
      %s121 = sor.u32 %s119, %s120
      %p122 = scmp.eq.s32.totalorder %s121, 0
      %s124 = sadd.s32 %s123, 1
      %s125 = scalar_select %p122, %s123, %s124
      %p128 = pneg %p122
      %p129 = scmp.eq.s32.totalorder %s19, 15
      %p130 = por %p128, %p129
      %p131 = scmp.ne.s32.totalorder %s123, %s126
      %p132 = scmp.eq.s32.totalorder %s19, 0
      %p133 = por %p131, %p132
      %p134 = scmp.ne.s32.totalorder %s123, %s126
      %p135 = scmp.eq.s32.totalorder %s24, 15
      %p136 = por %p134, %p135
      %p137 = scmp.ne.s32.totalorder %s126, %s127
      %p138 = scmp.eq.s32.totalorder %s24, 0
      %p139 = por %p137, %p138
      %p140 = scmp.ne.s32.totalorder %s126, %s127
      %p141 = scmp.eq.s32.totalorder %s25, 15
      %p142 = por %p140, %p141
      %p144 = scmp.ne.s32.totalorder %s127, %s143
      %p145 = scmp.eq.s32.totalorder %s25, 0
      %p146 = por %p144, %p145
      %p147 = scmp.le.s32.totalorder 1, %s19
      %p148 = scmp.lt.s32.totalorder %s19, 17
      %p149 = pnand %p147, %p148
      %p150 = pneg %p149
      // Predicated region
      $region9: #{tpu_custom_call.1} parent=5 // pred_check
        _
      $region10: #{tpu_custom_call.1} parent=5 // pred_check_branch
        %152 = sbr.rel (%p149) target = $region12
      $region11: #{tpu_custom_call.1} parent=5 // pred_region
        %s153 = ssub.s32 %s19, 1
        // Predicated region
        $region13: #{tpu_custom_call.1} parent=11 // pred_check
          %p154 = pneg %p59
        $region14: #{tpu_custom_call.1} parent=11 // pred_check_branch
          %156 = sbr.rel (%p154) target = $region16
        $region15: #{tpu_custom_call.1} parent=11 // pred_region
          _
        $region16: #{tpu_custom_call.1} parent=11 // pred_fallthru
          _
      $region12: #{tpu_custom_call.1} parent=5 // pred_fallthru
        _
      %p157 = scmp.lt.s32.totalorder %s19, 16
      // Predicated region
      $region17: #{tpu_custom_call.1} parent=5 // pred_check
        %p158 = pneg %p157
      $region18: #{tpu_custom_call.1} parent=5 // pred_check_branch
        %160 = sbr.rel (%p158) target = $region20
      $region19: #{tpu_custom_call.1} parent=5 // pred_region
        // Predicated region
        $region21: #{tpu_custom_call.1} parent=19 // pred_check
          %p161 = pneg %p79
        $region22: #{tpu_custom_call.1} parent=19 // pred_check_branch
          %163 = sbr.rel (%p161) target = $region24
        $region23: #{tpu_custom_call.1} parent=19 // pred_region
          %s164 = smul.u32 16, %s28
          %p165 = scmp.lt.s32.totalorder %s164, 63
          %s166 = scalar_select %p165, %s164, 63
          %s167 = smul.addr %s166, 8
          %s168 = scalar_lea.vmem %s2, %s167
          %s169 = smul.u32 16, %s28
        $region24: #{tpu_custom_call.1} parent=19 // pred_fallthru
          _
        // Predicated region
        $region25: #{tpu_custom_call.1} parent=19 // pred_check
          %p170 = pneg %p105
        $region26: #{tpu_custom_call.1} parent=19 // pred_check_branch
          %172 = sbr.rel (%p170) target = $region28
        $region27: #{tpu_custom_call.1} parent=19 // pred_region
          %p173 = scmp.lt.s32.totalorder %s28, 3
          %s174 = scalar_select %p173, %s28, 3
          %s175 = scalar_lea.vmem %s3, %s174
        $region28: #{tpu_custom_call.1} parent=19 // pred_fallthru
          _
      $region20: #{tpu_custom_call.1} parent=5 // pred_fallthru
        _
      %p176 = scmp.le.s32.totalorder 1, %s19
      %p177 = scmp.lt.s32.totalorder %s19, 17
      %p178 = pnand %p176, %p177
      %p179 = pneg %p178
      // Predicated region
      $region29: #{tpu_custom_call.1} parent=5 // pred_check
        _
      $region30: #{tpu_custom_call.1} parent=5 // pred_check_branch
        %181 = sbr.rel (%p178) target = $region32
      $region31: #{tpu_custom_call.1} parent=5 // pred_region
        %s182 = ssub.s32 %s19, 1
        %p183 = pneg %p59
        %p184 = pneg %p56
        %s185 = smul.u32 16, %s31
        %p186 = scmp.lt.s32.totalorder %s185, 63
        %s187 = scalar_select %p186, %s185, 63
        %s188 = smul.addr %s187, 8
        %s189 = scalar_lea.vmem %s2, %s188
        %p190 = pneg %p85
        %p191 = pneg %p82
        %p192 = scmp.lt.s32.totalorder %s31, 3
        %s193 = scalar_select %p192, %s31, 3
        %s194 = scalar_lea.vmem %s3, %s193
        %p195 = pneg %p111
        %p196 = pneg %p108
        %p197 = pneg %p139
        %p198 = pneg %p136
        %s199 = sand.u32 %s126, 1
        %s200 = scalar_lea.sflag [#allocation8], %s199
        %s201 = sand.u32 %s126, 1
        %s202 = smul.addr %s201, 8
        %s203 = scalar_lea.vmem [#allocation7], %s202
        %s204 = smul.u32 16, %s31
        %p205 = scmp.lt.s32.totalorder %s204, 63
        %s206 = scalar_select %p205, %s204, 63
        %s207 = smul.addr %s206, 8
        %s208 = scalar_lea.vmem %s2, %s207
        %s209 = smul.u32 16, %s31
        %p210 = scmp.lt.s32.totalorder %s31, 3
        %s211 = scalar_select %p210, %s31, 3
        %s212 = scalar_lea.vmem %s3, %s211
        %p213 = scmp.eq.s32.totalorder %s30, 0
        %p214 = scmp.eq.s32.totalorder %s31, 0
        %p215 = pnand %p213, %p214
        %p216 = pneg %p215
        // Predicated region
        $region33: #{tpu_custom_call.1} parent=31 // pred_check
          _
        $region34: #{tpu_custom_call.1} parent=31 // pred_check_branch
          %218 = sbr.rel (%p215) target = $region36
        $region35: #{tpu_custom_call.1} parent=31 // pred_region
          loop: start=0, step=1, limit=8
          $region37: #{tpu_custom_call.1} parent=35 // loop_pre_header
            _
          $region38: #{tpu_custom_call.1} parent=35 // loop_header
            %s220 = sphi 0, %s224
            %p221 = scmp.ge.s32.totalorder %s220, 8
          $region39: #{tpu_custom_call.1} parent=35 // loop_header_branch
            %223 = sbr.rel (%p221) target = $region43
          $region40: #{tpu_custom_call.1} parent=35 // loop_body
            %s225 = smul.u32 %s29, 8
            %s226 = sadd.s32 %s225, %s220
            %s227 = smul.u32 %s226, 4
            %s228 = sld [smem:[#allocation6 + %s227]]
            %s229 = scalar_lea.vmem %s1, %s228
            %v230 = vld [vmem:[%s229] sm:$0x1]
            %s231 = sadd.s32 %s227, 1
            %s232 = sld [smem:[#allocation6 + %s231]]
            %s233 = scalar_lea.vmem %s1, %s232
            %v234 = vld [vmem:[%s233] sm:$0x1]
            %v235 = vadd.f32 %v230, %v234
            %s236 = sadd.s32 %s227, 2
            %s237 = sld [smem:[#allocation6 + %s236]]
            %s238 = scalar_lea.vmem %s1, %s237
            %v239 = vld [vmem:[%s238] sm:$0x1]
            %v240 = vadd.f32 %v235, %v239
            %s241 = sadd.s32 %s227, 3
            %s242 = sld [smem:[#allocation6 + %s241]]
            %s243 = scalar_lea.vmem %s1, %s242
            %v244 = vld [vmem:[%s243] sm:$0x1]
            %v245 = vadd.f32 %v240, %v244
            %v246 = vmul.f32 %v245, 0.25
            %s247 = scalar_lea.vmem [#allocation2], %s220
            %vm248 = vcmask 516096
            %249 = vst.msk [vmem:[%s247] sm:$0x1] %vm248, %v246
          $region41: #{tpu_custom_call.1} parent=35 // loop_footer
            %s224 = sadd.s32 1, %s220
          $region42: #{tpu_custom_call.1} parent=35 // loop_footer_branch
            %219 = sbr.rel target = $region38
          $region43: #{tpu_custom_call.1} parent=35 // loop_exit
            _
          %vm250 = vcmask 7168
          %251 = vst.msk [vmem:[#allocation3] sm:$0xff] %vm250, -inf
          %252 = vst.msk [vmem:[#allocation4] sm:$0xff] %vm250, 0.0
        $region36: #{tpu_custom_call.1} parent=31 // pred_fallthru
          _
        %v253 = vld [vmem:[#allocation2] sm:$0xff]
        %v254 = vld [vmem:[%s208] sm:$0xff]
        %v255 = vld [vmem:[%s208 + $0x8] sm:$0xff]
        %v256 = vld [vmem:[%s208 + $0x10] sm:$0xff]
        %v257 = vld [vmem:[%s208 + $0x18] sm:$0xff]
        %v258 = vld [vmem:[%s208 + $0x20] sm:$0xff]
        %v259 = vld [vmem:[%s208 + $0x28] sm:$0xff]
        %v260 = vld [vmem:[%s208 + $0x30] sm:$0xff]
        %v261 = vld [vmem:[%s208 + $0x38] sm:$0xff]
        %v262 = vld [vmem:[%s208 + $0x40] sm:$0xff]
        %v263 = vld [vmem:[%s208 + $0x48] sm:$0xff]
        %v264 = vld [vmem:[%s208 + $0x50] sm:$0xff]
        %v265 = vld [vmem:[%s208 + $0x58] sm:$0xff]
        %v266 = vld [vmem:[%s208 + $0x60] sm:$0xff]
        %v267 = vld [vmem:[%s208 + $0x68] sm:$0xff]
        %v268 = vld [vmem:[%s208 + $0x70] sm:$0xff]
        %v269 = vld [vmem:[%s208 + $0x78] sm:$0xff]
        %v270 = vld [vmem:[%s212] sm:$0x1]
        %v272 = vlaneseq
        %v273 = vshrl.u32 %v272, 7
        %v274 = vsub.s32 0, %v273
        %v275 = vrot.slane %v270, %v274
        %vm277 = vcmask 523264
        %v279 = vsel %vm277, %v253, 0
        %v282 = vsel %vm277, %v254, 0
        %v285 = vsel %vm277, %v255, 0
        %v288 = vsel %vm277, %v256, 0
        %v291 = vsel %vm277, %v257, 0
        %v294 = vsel %vm277, %v258, 0
        %v297 = vsel %vm277, %v259, 0
        %v300 = vsel %vm277, %v260, 0
        %v303 = vsel %vm277, %v261, 0
        %v306 = vsel %vm277, %v262, 0
        %v309 = vsel %vm277, %v263, 0
        %v312 = vsel %vm277, %v264, 0
        %v315 = vsel %vm277, %v265, 0
        %v318 = vsel %vm277, %v266, 0
        %v321 = vsel %vm277, %v267, 0
        %v324 = vsel %vm277, %v268, 0
        %v327 = vsel %vm277, %v269, 0
        %329 = vmatprep.subr.mxu0 0.0
        %330 = vmatpush1.xpose.msra.mxu0 %v282
        %331 = vmatprep.subr.mxu0 0.0
        %332 = vmatpush1.xpose.msra.mxu0 %v285
        %333 = vmatprep.subr.mxu0 0.0
        %334 = vmatpush1.xpose.msra.mxu0 %v288
        %335 = vmatprep.subr.mxu0 0.0
        %336 = vmatpush1.xpose.msra.mxu0 %v291
        %337 = vmatprep.subr.mxu0 0.0
        %338 = vmatpush1.xpose.msra.mxu0 %v294
        %339 = vmatprep.subr.mxu0 0.0
        %340 = vmatpush1.xpose.msra.mxu0 %v297
        %341 = vmatprep.subr.mxu0 0.0
        %342 = vmatpush1.xpose.msra.mxu0 %v300
        %343 = vmatprep.subr.mxu0 0.0
        %344 = vmatpush1.xpose.msra.mxu0 %v303
        %345 = vmatprep.subr.mxu0 0.0
        %346 = vmatpush1.xpose.msra.mxu0 %v306
        %347 = vmatprep.subr.mxu0 0.0
        %348 = vmatpush1.xpose.msra.mxu0 %v309
        %349 = vmatprep.subr.mxu0 0.0
        %350 = vmatpush1.xpose.msra.mxu0 %v312
        %351 = vmatprep.subr.mxu0 0.0
        %352 = vmatpush1.xpose.msra.mxu0 %v315
        %353 = vmatprep.subr.mxu0 0.0
        %354 = vmatpush1.xpose.msra.mxu0 %v318
        %355 = vmatprep.subr.mxu0 0.0
        %356 = vmatpush1.xpose.msra.mxu0 %v321
        %357 = vmatprep.subr.mxu0 0.0
        %358 = vmatpush1.xpose.msra.mxu0 %v324
        %359 = vmatprep.subr.mxu0 0.0
        %360 = vmatpush1.xpose.msra.mxu0 %v327
        %361 = vmatprep.subr.mxu0 0.0
        %362 = vmatpush1.xpose.msra.mxu0 0.0
        %363 = vmatprep.subr.mxu0 0.0
        %364 = vmatpush1.xpose.msra.mxu0 0.0
        %365 = vmatprep.subr.mxu0 0.0
        %366 = vmatpush1.xpose.msra.mxu0 0.0
        %367 = vmatprep.subr.mxu0 0.0
        %368 = vmatpush1.xpose.msra.mxu0 0.0
        %369 = vmatprep.subr.mxu0 0.0
        %370 = vmatpush1.xpose.msra.mxu0 0.0
        %371 = vmatprep.subr.mxu0 0.0
        %372 = vmatpush1.xpose.msra.mxu0 0.0
        %373 = vmatprep.subr.mxu0 0.0
        %374 = vmatpush1.xpose.msra.mxu0 0.0
        %375 = vmatprep.subr.mxu0 0.0
        %376 = vmatpush1.xpose.msra.mxu0 0.0
        %377 = vmatprep.subr.mxu0 0.0
        %378 = vmatpush1.xpose.msra.mxu0 0.0
        %379 = vmatprep.subr.mxu0 0.0
        %380 = vmatpush1.xpose.msra.mxu0 0.0
        %381 = vmatprep.subr.mxu0 0.0
        %382 = vmatpush1.xpose.msra.mxu0 0.0
        %383 = vmatprep.subr.mxu0 0.0
        %384 = vmatpush1.xpose.msra.mxu0 0.0
        %385 = vmatprep.subr.mxu0 0.0
        %386 = vmatpush1.xpose.msra.mxu0 0.0
        %387 = vmatprep.subr.mxu0 0.0
        %388 = vmatpush1.xpose.msra.mxu0 0.0
        %389 = vmatprep.subr.mxu0 0.0
        %390 = vmatpush1.xpose.msra.mxu0 0.0
        %391 = vmatprep.subr.mxu0 0.0
        %392 = vmatpush1.xpose.msra.mxu0 0.0
        %393 = vmatprep.mubr.f32.mxu0 0.0
        %394 = vmatmul.mubr.f32.gmra.mrb[0].mxu0 %v279
        %v395 = vpop.f32.mrb[0].mxu0
        %v396 = vadd.f32 %v275, %v395
        %v397 = vpop.f32.mrb[0].mxu0
        %398 = vdwg.mxu0
        // Predicated region
        $region44: #{tpu_custom_call.1} parent=31 // pred_check
          %p399 = pneg %p213
        $region45: #{tpu_custom_call.1} parent=31 // pred_check_branch
          %401 = sbr.rel (%p399) target = $region47
        $region46: #{tpu_custom_call.1} parent=31 // pred_region
          %v402 = vld [vmem:[#allocation3] sm:$0xff]
          %403 = vmax.xlane.f32.xlu0 %v396
          %v404 = vpop.xlane.xlu0 %403
          %v405 = vmax.f32 %v402, %v404
          %v406 = vld [vmem:[#allocation4] sm:$0xff]
          %v407 = vsub.f32 %v402, %v405
          %v408 = vmul.f32 %v407, 1.442695
          %v409 = vpow.pop %v408
          %v410 = vmul.f32 %v406, %v409
          %412 = vset.pattern.permute.xlu0 0
          %413 = vperm.xlu0 %412, %v405
          %v414 = vpop.permute.xlu0 %413
          %v416 = vsub.f32 %v396, %v414
          %v417 = vmul.f32 %v416, 1.442695
          %v418 = vpow.pop %v417
          %419 = vadd.xlane.f32.xlu0 %v418
          %v420 = vpop.xlane.xlu0 %419
          %v421 = vadd.f32 %v410, %v420
          %vm422 = vcmask 7168
          %423 = vst.msk [vmem:[#allocation4] sm:$0xff] %vm422, %v421
          %424 = vst.msk [vmem:[#allocation3] sm:$0xff] %vm422, %v405
          %425 = vst [vmem:[%s203] sm:$0xff] %v396
        $region47: #{tpu_custom_call.1} parent=31 // pred_fallthru
          _
        %p426 = scmp.eq.s32.totalorder %s30, 1
        // Predicated region
        $region48: #{tpu_custom_call.1} parent=31 // pred_check
          %p427 = pneg %p426
        $region49: #{tpu_custom_call.1} parent=31 // pred_check_branch
          %429 = sbr.rel (%p427) target = $region51
        $region50: #{tpu_custom_call.1} parent=31 // pred_region
          %v430 = vld [vmem:[#allocation3] sm:$0xff]
          %v431 = vld [vmem:[#allocation4] sm:$0xff]
          %v432 = vlog2.pop %v431
          %v433 = vmul.f32 %v432, 0.6931472
          %v434 = vadd.f32 %v430, %v433
          %436 = vset.pattern.permute.xlu0 0
          %437 = vperm.xlu0 %436, %v434
          %v438 = vpop.permute.xlu0 %437
          %v440 = vsub.f32 %v396, %v438
          %441 = vst [vmem:[%s203] sm:$0xff] %v440
        $region51: #{tpu_custom_call.1} parent=31 // pred_fallthru
          _
        %s442 = sand.u32 %s126, 1
        %s443 = scalar_lea.sflag [#allocation8], %s442
        %s444 = sand.u32 %s126, 1
        %s445 = smul.addr %s444, 8
        %s446 = scalar_lea.vmem [#allocation7], %s445
        // Predicated region
        $region52: #{tpu_custom_call.1} parent=31 // pred_check
          %p447 = pneg %p136
        $region53: #{tpu_custom_call.1} parent=31 // pred_check_branch
          %449 = sbr.rel (%p447) target = $region55
        $region54: #{tpu_custom_call.1} parent=31 // pred_region
          %s451 = ssub.s32 128, 128
          %452 = vsyncadd %s443, %s451
          %s453 = smul.addr %s29, 4
          %s454 = sadd.s32 %s31, %s453
          %s455 = smul.addr %s454, 128
          %s456 = scalar_lea.hbm %s4, %s455
          %s458 = sshll.u32 %s446, 4
          %s459 = int_to_ptr.vmem [resolvable:$true] %s458
          %461 = dma.vmem_to_hbm [thread:$0]  %s459, 128, %s456, %s443
        $region55: #{tpu_custom_call.1} parent=31 // pred_fallthru
          _
      $region32: #{tpu_custom_call.1} parent=5 // pred_fallthru
        _
      %p462 = scmp.le.s32.totalorder 2, %s19
      // Predicated region
      $region56: #{tpu_custom_call.1} parent=5 // pred_check
        %p463 = pneg %p462
      $region57: #{tpu_custom_call.1} parent=5 // pred_check_branch
        %465 = sbr.rel (%p463) target = $region59
      $region58: #{tpu_custom_call.1} parent=5 // pred_region
        %s466 = ssub.s32 %s19, 2
        // Predicated region
        $region60: #{tpu_custom_call.1} parent=58 // pred_check
          %p467 = pneg %p142
        $region61: #{tpu_custom_call.1} parent=58 // pred_check_branch
          %469 = sbr.rel (%p467) target = $region63
        $region62: #{tpu_custom_call.1} parent=58 // pred_region
          %s470 = sand.u32 %s127, 1
          %s471 = scalar_lea.sflag [#allocation8], %s470
          %s472 = sand.u32 %s127, 1
          %s473 = smul.addr %s472, 8
          %s474 = scalar_lea.vmem [#allocation7], %s473
          %475 = dma.done %s471, 128
        $region63: #{tpu_custom_call.1} parent=58 // pred_fallthru
          _
      $region59: #{tpu_custom_call.1} parent=5 // pred_fallthru
        _
    $region6: #{tpu_custom_call.1} parent=1 // loop_footer
      %s23 = sadd.s32 1, %s19
    $region7: #{tpu_custom_call.1} parent=1 // loop_footer_branch
      %18 = sbr.rel target = $region3
    $region8: #{tpu_custom_call.1} parent=1 // loop_exit
      _
    %476 = vsyncpa [#allocation8], 1
    %s477 = scalar_lea.sflag [#allocation8], 1
    %478 = vsyncpa %s477, 1

</llo_original>
